<compile_context>
chip_gen: v6e
topology: v6e:2x2x1
jax: 0.10.0
libtpu: 0.0.40
codegen_flags: <defaults>
</compile_context>

<pallas_src>
import functools

import jax
import jax.numpy as jnp
from jax import lax
from jax.experimental import pallas as pl
from jax.experimental.pallas import tpu as pltpu


MARGIN = 2.0
EPS = 1e-8  # matches torch.nn.functional.cosine_similarity default eps


def _round_up(x, m):
    return (x + m - 1) // m * m


def _contrastive_loss_kernel(img_ref, cap_ref, lbl_ref, out_ref, *, margin):
    img = img_ref[...].astype(jnp.float32)          # (TB, Dp)
    cap = cap_ref[...].astype(jnp.float32)          # (TB, Dp)
    lbl = lbl_ref[...].astype(jnp.float32)          # (TB, 1)

    # Per-row cosine similarity along the lane (embedding) axis.
    dot = jnp.sum(img * cap, axis=-1, keepdims=True)        # (TB, 1)
    n_img_sq = jnp.sum(img * img, axis=-1, keepdims=True)   # (TB, 1)
    n_cap_sq = jnp.sum(cap * cap, axis=-1, keepdims=True)   # (TB, 1)
    # 1 / max(||x||, eps) == rsqrt(max(||x||^2, eps^2)); rsqrt runs on the EUP.
    inv_den = (lax.rsqrt(jnp.maximum(n_img_sq, EPS * EPS)) *
               lax.rsqrt(jnp.maximum(n_cap_sq, EPS * EPS)))
    sim = dot * inv_den                                      # (TB, 1)

    # Contrastive loss terms. Padded rows (zero embeddings, label 0) give 0.
    hinge = jnp.maximum(margin - sim, 0.0)
    per_row = (1.0 - lbl) * sim * sim + lbl * hinge * hinge  # (TB, 1)

    partial = jnp.sum(per_row)                               # scalar partial sum
    # Lane-dense (8,128) block store (unmasked vst); wrapper reads [0, 0].
    out_ref[...] = jnp.full((1, 8, 128), partial, dtype=jnp.float32)


def contrastive_loss(image_embeddings, caption_embeddings, labels,
                     margin=MARGIN, block_rows=None):
    """image_embeddings, caption_embeddings: (B, D); labels: (B,) -> scalar loss."""
    B, D = image_embeddings.shape

    # Lane-dense embedding dim: zero-pad D to a multiple of 128.
    Dp = _round_up(D, 128)

    # Batch tile: ~2 MiB per f32 input block (fits double-buffering within the
    # scoped-VMEM defaults on v5e/v6e and v7x's smaller 64 MiB VMEM), multiple
    # of 8 sublanes, and never bigger than the (8-rounded) batch itself.
    if block_rows is None:
        bytes_per_row = Dp * 4
        tb = (2 * 1024 * 1024) // bytes_per_row
        tb = max(8, min(2048, (tb // 8) * 8))
    else:
        tb = max(8, (block_rows // 8) * 8)
    tb = min(tb, _round_up(B, 8))

    Bp = _round_up(B, tb)
    nb = Bp // tb

    # Zero-pad batch/embedding dims; padded rows contribute exactly 0 to the sum.
    pad_b, pad_d = Bp - B, Dp - D
    if pad_b or pad_d:
        image_embeddings = jnp.pad(image_embeddings, ((0, pad_b), (0, pad_d)))
        caption_embeddings = jnp.pad(caption_embeddings, ((0, pad_b), (0, pad_d)))
    labels_2d = jnp.pad(labels.astype(jnp.float32).reshape(B, 1), ((0, pad_b), (0, 0)))

    kernel = functools.partial(_contrastive_loss_kernel, margin=float(margin))

    partials = pl.pallas_call(
        kernel,
        out_shape=jax.ShapeDtypeStruct((nb, 8, 128), jnp.float32),
        grid_spec=pltpu.PrefetchScalarGridSpec(
            num_scalar_prefetch=0,
            grid=(nb,),
            in_specs=[
                pl.BlockSpec((tb, Dp), lambda i: (i, 0)),
                pl.BlockSpec((tb, Dp), lambda i: (i, 0)),
                pl.BlockSpec((tb, 1), lambda i: (i, 0)),
            ],
            out_specs=pl.BlockSpec((1, 8, 128), lambda i: (i, 0, 0)),
        ),
        compiler_params=pltpu.CompilerParams(
            dimension_semantics=("parallel",)),
    )(image_embeddings, caption_embeddings, labels_2d)

    # Tiny final reduction in the wrapper; divide by the true (unpadded) batch.
    return jnp.sum(partials[:, 0, 0]) / jnp.float32(B)


if __name__ == "__main__":
    key = jax.random.PRNGKey(0)
    k_img, k_cap, k_lbl = jax.random.split(key, 3)

    B, D = 8, 32
    img = jax.random.normal(k_img, (B, D), dtype=jnp.float32)
    cap = jax.random.normal(k_cap, (B, D), dtype=jnp.float32)
    labels = jax.random.bernoulli(k_lbl, 0.5, (B,)).astype(jnp.float32)

    loss = contrastive_loss(img, cap, labels)
    jax.block_until_ready(loss)

    # pure-JAX reference (torch F.cosine_similarity semantics)
    n_img = jnp.linalg.norm(img, axis=1)
    n_cap = jnp.linalg.norm(cap, axis=1)
    sim = jnp.sum(img * cap, axis=1) / (jnp.maximum(n_img, EPS) * jnp.maximum(n_cap, EPS))
    ref = jnp.mean((1.0 - labels) * sim ** 2 +
                   labels * jnp.maximum(MARGIN - sim, 0.0) ** 2)
    assert jnp.allclose(loss, ref, atol=1e-5, rtol=1e-4), (loss, ref)

    print("KERNEL_OK")
</pallas_src>

<mosaic_0001>
module attributes {stable_mosaic.version = 11 : i64} {
  func.func @_contrastive_loss_kernel(%arg0: i32, %arg1: memref<8x128xf32, #tpu.memory_space<vmem>>, %arg2: memref<8x128xf32, #tpu.memory_space<vmem>>, %arg3: memref<8x1xf32, #tpu.memory_space<vmem>>, %arg4: memref<1x8x128xf32, #tpu.memory_space<vmem>>) attributes {dimension_semantics = [#tpu.dimension_semantics<parallel>], iteration_bounds = array<i64: 1>, scalar_prefetch = 0 : i64, scratch_operands = 0 : i64, tpu.core_type = #tpu.core_type<tc>, window_params = [{transform_indices = @transform_0, window_bounds = array<i64: 8, 128>}, {transform_indices = @transform_1, window_bounds = array<i64: 8, 128>}, {transform_indices = @transform_2, window_bounds = array<i64: 8, 1>}, {transform_indices = @transform_3, window_bounds = array<i64: 1, 8, 128>}]} {
    %c0 = arith.constant 0 : index
    %c0_0 = arith.constant 0 : index
    %0 = vector.load %arg1[%c0, %c0_0] : memref<8x128xf32, #tpu.memory_space<vmem>>, vector<8x128xf32>
    %c0_1 = arith.constant 0 : index
    %c0_2 = arith.constant 0 : index
    %1 = vector.load %arg2[%c0_1, %c0_2] : memref<8x128xf32, #tpu.memory_space<vmem>>, vector<8x128xf32>
    %c0_3 = arith.constant 0 : index
    %c0_4 = arith.constant 0 : index
    %2 = vector.load %arg3[%c0_3, %c0_4] : memref<8x1xf32, #tpu.memory_space<vmem>>, vector<8x1xf32>
    %3 = arith.mulf %0, %1 : vector<8x128xf32>
    %cst = arith.constant dense<0.000000e+00> : vector<8xf32>
    %4 = vector.multi_reduction <add>, %3, %cst [1] : vector<8x128xf32> to vector<8xf32>
    %5 = vector.shape_cast %4 : vector<8xf32> to vector<8x1xf32>
    %6 = arith.mulf %0, %0 : vector<8x128xf32>
    %cst_5 = arith.constant dense<0.000000e+00> : vector<8xf32>
    %7 = vector.multi_reduction <add>, %6, %cst_5 [1] : vector<8x128xf32> to vector<8xf32>
    %8 = vector.shape_cast %7 : vector<8xf32> to vector<8x1xf32>
    %9 = arith.mulf %1, %1 : vector<8x128xf32>
    %cst_6 = arith.constant dense<0.000000e+00> : vector<8xf32>
    %10 = vector.multi_reduction <add>, %9, %cst_6 [1] : vector<8x128xf32> to vector<8xf32>
    %11 = vector.shape_cast %10 : vector<8xf32> to vector<8x1xf32>
    %cst_7 = arith.constant 1.000000e-16 : f32
    %12 = vector.broadcast %cst_7 : f32 to vector<8x1xf32>
    %13 = arith.maximumf %8, %12 : vector<8x1xf32>
    %14 = math.rsqrt %13 : vector<8x1xf32>
    %cst_8 = arith.constant 1.000000e-16 : f32
    %15 = vector.broadcast %cst_8 : f32 to vector<8x1xf32>
    %16 = arith.maximumf %11, %15 : vector<8x1xf32>
    %17 = math.rsqrt %16 : vector<8x1xf32>
    %18 = arith.mulf %14, %17 : vector<8x1xf32>
    %19 = arith.mulf %5, %18 : vector<8x1xf32>
    %cst_9 = arith.constant 2.000000e+00 : f32
    %20 = vector.broadcast %cst_9 : f32 to vector<8x1xf32>
    %21 = arith.subf %20, %19 : vector<8x1xf32>
    %cst_10 = arith.constant 0.000000e+00 : f32
    %22 = vector.broadcast %cst_10 : f32 to vector<8x1xf32>
    %23 = arith.maximumf %21, %22 : vector<8x1xf32>
    %cst_11 = arith.constant 1.000000e+00 : f32
    %24 = vector.broadcast %cst_11 : f32 to vector<8x1xf32>
    %25 = arith.subf %24, %2 : vector<8x1xf32>
    %26 = arith.mulf %25, %19 : vector<8x1xf32>
    %27 = arith.mulf %26, %19 : vector<8x1xf32>
    %28 = arith.mulf %2, %23 : vector<8x1xf32>
    %29 = arith.mulf %28, %23 : vector<8x1xf32>
    %30 = arith.addf %27, %29 : vector<8x1xf32>
    %31 = vector.shape_cast %30 : vector<8x1xf32> to vector<1x8x1xf32>
    %cst_12 = arith.constant dense<0.000000e+00> : vector<1xf32>
    %32 = vector.multi_reduction <add>, %31, %cst_12 [1, 2] : vector<1x8x1xf32> to vector<1xf32>
    %33 = vector.shape_cast %32 : vector<1xf32> to vector<1x1x1xf32>
    %34 = vector.extract %33[0, 0, 0] : f32 from vector<1x1x1xf32>
    %35 = vector.broadcast %34 : f32 to vector<1x8x128xf32>
    %c0_13 = arith.constant 0 : index
    %c0_14 = arith.constant 0 : index
    %c0_15 = arith.constant 0 : index
    %36 = vector.load %arg4[%c0_13, %c0_14, %c0_15] : memref<1x8x128xf32, #tpu.memory_space<vmem>>, vector<1x8x128xf32>
    tpu.vector_store %arg4[%c0_13, %c0_14, %c0_15], %35 {strides = array<i32>} : memref<1x8x128xf32, #tpu.memory_space<vmem>>, vector<1x8x128xf32>,
    return
  }
  func.func @transform_0(%arg0: i32) -> (i32, i32) {
    %c0_i32 = arith.constant 0 : i32
    %c0_i32_0 = arith.constant 0 : i32
    return %arg0, %c0_i32 : i32, i32
  }
  func.func @transform_1(%arg0: i32) -> (i32, i32) {
    %c0_i32 = arith.constant 0 : i32
    %c0_i32_0 = arith.constant 0 : i32
    return %arg0, %c0_i32 : i32, i32
  }
  func.func @transform_2(%arg0: i32) -> (i32, i32) {
    %c0_i32 = arith.constant 0 : i32
    %c0_i32_0 = arith.constant 0 : i32
    return %arg0, %c0_i32 : i32, i32
  }
  func.func @transform_3(%arg0: i32) -> (i32, i32, i32) {
    %c0_i32 = arith.constant 0 : i32
    %c0_i32_0 = arith.constant 0 : i32
    %c0_i32_1 = arith.constant 0 : i32
    return %arg0, %c0_i32, %c0_i32_0 : i32, i32, i32
  }
}

</mosaic_0001>

<llo_original>
// kernel: tpu_custom_call.1
$region0: #{tpu_custom_call.1}
  #allocation0 [shape = 'u32[]', space=smem, size = 0x4, offset = 0x4, fixed_abs, tag = 'smem constant byte address 0x4 - core index']
  #allocation1 [shape = 'u32[144,128]{1,0:T(1,128)}', space=vmem, size = 0x12000, scoped, tag = 'internal scratch']
  %s0 = inlined_call_operand.vmem [shape: f32[8,128], index: 0, kind: input, shape index: {}]
  %s1 = inlined_call_operand.hbm [shape: f32[8,128], index: 1, kind: input, shape index: {}]
  %s2 = inlined_call_operand.vmem [shape: f32[8,1], index: 2, kind: input, shape index: {}]
  %s3 = inlined_call_operand.hbm [shape: f32[1,8,128], index: 3, kind: output, shape index: {}]
  %s4 = sld [smem:[#allocation0]]
  $region26: #{tpu_custom_call.1} parent=0
    _
  %s6 = ssub.s32 1, %s4
  %s7 = scalar_select 0, %s6, %s4
  $region1: #{tpu_custom_call.1} parent=0
    #allocation2 [shape = 'u8[4096]{0}', space=vmem, size = 0x1000, scoped, tag = 'input window, operand 1, single buffered']
    #allocation3 [shape = 's32[1]{0}', space=sflag, size = 0x4, scoped, tag = 'scoped memory for tpu_custom_call.1']
    #allocation4 [shape = 's32[1]{0}', space=sflag, size = 0x4, scoped, tag = 'scoped memory for tpu_custom_call.1']
    #allocation5 [shape = 'u8[4096]{0}', space=vmem, size = 0x1000, scoped, tag = 'output window, operand 0, single buffered']
    %8 = vsyncpa [#allocation3], 0
    %9 = vsyncpa [#allocation4], 0
    // Predicated region
    $region2: #{tpu_custom_call.1} parent=1 // pred_check
      _
    $region3: #{tpu_custom_call.1} parent=1 // pred_check_branch
      %11 = sbr.rel (0) target = $region5
    $region4: #{tpu_custom_call.1} parent=1 // pred_region
      _
    $region5: #{tpu_custom_call.1} parent=1 // pred_fallthru
      _
    // Predicated region
    $region6: #{tpu_custom_call.1} parent=1 // pred_check
      _
    $region7: #{tpu_custom_call.1} parent=1 // pred_check_branch
      %13 = sbr.rel (0) target = $region9
    $region8: #{tpu_custom_call.1} parent=1 // pred_region
      %s15 = ssub.s32 128, 128
      %16 = vsyncadd [#allocation3], %s15
      %s18 = sshll.u32 [#allocation2], 4
      %s19 = int_to_ptr.vmem [resolvable:$true] %s18
      %21 = dma.hbm_to_vmem [thread:$0]  %s1, 128, %s19, [#allocation3]
    $region9: #{tpu_custom_call.1} parent=1 // pred_fallthru
      _
    // Predicated region
    $region10: #{tpu_custom_call.1} parent=1 // pred_check
      _
    $region11: #{tpu_custom_call.1} parent=1 // pred_check_branch
      %23 = sbr.rel (0) target = $region13
    $region12: #{tpu_custom_call.1} parent=1 // pred_region
      _
    $region13: #{tpu_custom_call.1} parent=1 // pred_fallthru
      _
    // Predicated region
    $region14: #{tpu_custom_call.1} parent=1 // pred_check
      _
    $region15: #{tpu_custom_call.1} parent=1 // pred_check_branch
      %25 = sbr.rel (0) target = $region17
    $region16: #{tpu_custom_call.1} parent=1 // pred_region
      %26 = dma.done [#allocation3], 128
    $region17: #{tpu_custom_call.1} parent=1 // pred_fallthru
      _
    %v27 = vld [vmem:[%s0] sm:$0xff]
    %v28 = vld [vmem:[#allocation2] sm:$0xff]
    %v29 = vld [vmem:[%s2] sm:$0xff]
    %v30 = vmul.f32 %v27, %v28
    %31 = vadd.xlane.f32.xlu0 %v30
    %v32 = vpop.xlane.xlu0 %31
    %v33 = vmul.f32 %v27, %v27
    %34 = vadd.xlane.f32.xlu0 %v33
    %v35 = vpop.xlane.xlu0 %34
    %v36 = vmul.f32 %v28, %v28
    %37 = vadd.xlane.f32.xlu0 %v36
    %v38 = vpop.xlane.xlu0 %37
    %v39 = vmax.f32 %v35, 1e-16
    %v40 = vrsqrt.pop %v39
    %v41 = vmax.f32 %v38, 1e-16
    %v42 = vrsqrt.pop %v41
    %v43 = vmul.f32 %v40, %v42
    %v44 = vmul.f32 %v32, %v43
    %v45 = vsub.f32 2.0, %v44
    %v46 = vmax.f32 %v45, 0.0
    %v47 = vsub.f32 1.0, %v29
    %v48 = vmul.f32 %v47, %v44
    %v49 = vmul.f32 %v48, %v44
    %v50 = vmul.f32 %v29, %v46
    %v51 = vmul.f32 %v50, %v46
    %v52 = vadd.f32 %v49, %v51
    %vm53 = vcmask 7168
    %v54 = vsel %vm53, %v52, 0.0
    %55 = vadd.xlane.f32.xlu0 %v54
    %v56 = vpop.xlane.xlu0 %55
    %v57 = vrot.slane %v56, 4
    %v58 = vadd.f32 %v56, %v57
    %v59 = vrot.slane %v58, 2
    %v60 = vadd.f32 %v58, %v59
    %v61 = vrot.slane %v60, 1
    %v62 = vadd.f32 %v60, %v61
    %s63 = vtos %v62
    %v64 = vstv %s63
    %65 = vst [vmem:[#allocation5] sm:$0xff] %v64
    // Predicated region
    $region18: #{tpu_custom_call.1} parent=1 // pred_check
      _
    $region19: #{tpu_custom_call.1} parent=1 // pred_check_branch
      %67 = sbr.rel (0) target = $region21
    $region20: #{tpu_custom_call.1} parent=1 // pred_region
      %s69 = ssub.s32 128, 128
      %70 = vsyncadd [#allocation4], %s69
      %s72 = sshll.u32 [#allocation5], 4
      %s73 = int_to_ptr.vmem [resolvable:$true] %s72
      %75 = dma.vmem_to_hbm [thread:$0]  %s73, 128, %s3, [#allocation4]
    $region21: #{tpu_custom_call.1} parent=1 // pred_fallthru
      _
    // Predicated region
    $region22: #{tpu_custom_call.1} parent=1 // pred_check
      _
    $region23: #{tpu_custom_call.1} parent=1 // pred_check_branch
      %77 = sbr.rel (0) target = $region25
    $region24: #{tpu_custom_call.1} parent=1 // pred_region
      %78 = dma.done [#allocation4], 128
    $region25: #{tpu_custom_call.1} parent=1 // pred_fallthru
      _
    %79 = vsyncpa [#allocation3], 1
    %80 = vsyncpa [#allocation4], 1

</llo_original>
